<compile_context>
chip_gen: v7x
topology: tpu7x:2x2x1
jax: 0.10.0
libtpu: 0.0.40
codegen_flags: <defaults>
</compile_context>

<pallas_src>
import functools

import jax
import jax.numpy as jnp
from jax.experimental import pallas as pl
from jax.experimental.pallas import tpu as pltpu


def _round_up(a, b):
    return (a + b - 1) // b * b


def _pow2_tile(n, cap):
    """Smallest power-of-two >= min(n, cap), at least 128 (lane width)."""
    t = 128
    while t < n and t < cap:
        t *= 2
    return min(t, cap)


def _vmem_limit_bytes():
    # ~75% of physical VMEM: ~48 MiB on v7x (64 MiB), ~96 MiB on v5e/v6e (128 MiB).
    try:
        cap = pltpu.get_tpu_info().vmem_capacity_bytes
    except Exception:
        cap = 64 * 1024 * 1024
    return int(cap) * 3 // 4


def _sage_layer_kernel(adj_ref, xs_ref, xd_ref, wl_ref, wr_ref, b_ref, out_ref,
                       acc_ref, *, tk, resident):
    """One SAGEConv layer + ReLU, tiled over (dest block m, source block k).

    adj_ref : [TM, TK] int8   adjacency tile, rows = dest nodes, cols = source nodes
    xs_ref  : [TK, Fp] bf16   source-node features (streamed over k), or
              [Np, Fp] bf16   VMEM-resident slab sliced with pl.ds (resident=True)
    xd_ref  : [TM, Fp] bf16   dest-node features (root term, resident per m block)
    wl_ref  : [Fp, Hp] bf16   neighbor (aggregation) weight
    wr_ref  : [Fp, Hp] bf16   root weight
    b_ref   : [1, Hp]  f32    bias (last padded column may carry the next layer's 1)
    out_ref : [TM, Hp]        layer output block (bf16 for layer 1, f32 for layer 2)
    acc_ref : [TM, Fp] f32    VMEM accumulator for sum_j adj[i,j] * x[j]
    """
    k = pl.program_id(1)

    @pl.when(k == 0)
    def _():
        acc_ref[...] = jnp.zeros_like(acc_ref)

    a = adj_ref[...].astype(jnp.bfloat16)                  # 0/1 exact in bf16
    if resident:
        row0 = pl.multiple_of(k * tk, tk)
        xs = xs_ref[pl.ds(row0, tk), :]                    # slice the resident slab
    else:
        xs = xs_ref[...]                                   # streamed (TK, Fp) tile
    acc_ref[...] += jnp.dot(a, xs, preferred_element_type=jnp.float32)

    @pl.when(k == pl.num_programs(1) - 1)
    def _():
        acc = acc_ref[...]                                 # [TM, Fp] f32
        # last padded feature column is constant 1 -> its accumulation is the
        # in-degree; isolated nodes (deg == 0) aggregate to 0 (scatter-mean).
        deg = acc[:, -1:]
        inv = jnp.where(deg > 0.0, pl.reciprocal(deg, approx=True), 0.0)
        agg = (acc * inv).astype(jnp.bfloat16)             # mean aggregation
        h = jnp.dot(agg, wl_ref[...], preferred_element_type=jnp.float32)
        h += jnp.dot(xd_ref[...], wr_ref[...], preferred_element_type=jnp.float32)
        h += b_ref[...]
        out_ref[...] = jnp.maximum(h, 0.0).astype(out_ref.dtype)   # ReLU, lane-dense


def _sage_layer(adj_t, x_p, wl, wr, b, *, tm, tk, out_dtype, resident, vmem_limit):
    """Run one tiled SAGEConv+ReLU layer.  All inputs are pre-padded."""
    np_ = adj_t.shape[0]
    fp = x_p.shape[1]
    hp = wl.shape[1]
    nm, nk = np_ // tm, np_ // tk

    if resident:
        # whole feature slab lives in VMEM for the entire layer; sliced in-kernel.
        # TODO(synk): pipeline_mode=pl.Buffered(1) would drop the second buffer
        # of this grid-invariant slab (and of wl/wr) and halve its VMEM cost.
        xs_spec = pl.BlockSpec((np_, fp), lambda m, k: (0, 0))
    else:
        xs_spec = pl.BlockSpec((tk, fp), lambda m, k: (k, 0))

    grid_spec = pltpu.PrefetchScalarGridSpec(
        num_scalar_prefetch=0,
        grid=(nm, nk),
        in_specs=[
            pl.BlockSpec((tm, tk), lambda m, k: (m, k)),   # adjacency [dest, src]
            xs_spec,                                       # source-node features
            pl.BlockSpec((tm, fp), lambda m, k: (m, 0)),   # dest-node features (root)
            pl.BlockSpec((fp, hp), lambda m, k: (0, 0)),   # W_l (neighbor)
            pl.BlockSpec((fp, hp), lambda m, k: (0, 0)),   # W_r (root)
            pl.BlockSpec((1, hp), lambda m, k: (0, 0)),    # bias
        ],
        out_specs=pl.BlockSpec((tm, hp), lambda m, k: (m, 0)),
        scratch_shapes=[pltpu.VMEM((tm, fp), jnp.float32)],
    )
    kernel = functools.partial(_sage_layer_kernel, tk=tk, resident=resident)
    return pl.pallas_call(
        kernel,
        out_shape=jax.ShapeDtypeStruct((np_, hp), out_dtype),
        grid_spec=grid_spec,
        compiler_params=pltpu.CompilerParams(
            dimension_semantics=("parallel", "arbitrary"),
            vmem_limit_bytes=vmem_limit,
        ),
    )(adj_t, x_p, x_p, wl, wr, b)


def sage_encoder_forward(x, adj, pad_n, pos_idx, params, *, tm=512, tk=512):
    """x: [N, nfeat] f32, adj: [N, N] dense (edge j->i iff adj[j,i] != 0),
    pos_idx: [N] int32.  Returns [pad_n, nhid] with output[pos_idx] = encoder(x)."""
    n, nfeat = x.shape
    nhid = params["wl1"].shape[1]

    fp = _round_up(nfeat + 1, 128)        # +1 reserves the ones/degree column
    hp = _round_up(nhid + 1, 128)

    # power-of-two tiles, clipped down for tiny graphs; np_ divisible by both.
    tm = _pow2_tile(n, tm)
    tk = _pow2_tile(n, tk)
    np_ = _round_up(n, max(tm, tk))
    # TODO(synk): on v7x keep np_ // tm >= 2 at production sizes so the "parallel"
    # m axis shards across both TensorCores (automatic with tm=512 once N > 512).

    vmem_limit = _vmem_limit_bytes()

    def fits_resident(width):
        # double-buffered bf16 slab must leave headroom for adj tiles / acc / weights.
        return 2 * (np_ * width * 2) <= vmem_limit // 2

    # --- host-side layout prep (one-time) ---
    # adjacency binarized, transposed to [dest, src], packed to int8.
    # TODO(synk): bit-packing 8 edges/byte would cut the remaining N^2 HBM floor 8x.
    adj_t = jnp.zeros((np_, np_), jnp.int8).at[:n, :n].set(
        (adj.T != 0).astype(jnp.int8))

    # bf16 feature slab; trailing all-ones column -> in-degree via the same matmul.
    x_p = jnp.zeros((np_, fp), jnp.bfloat16).at[:n, :nfeat].set(
        x.astype(jnp.bfloat16))
    x_p = x_p.at[:, fp - 1].set(1.0)

    def pad_weight(w, rows):
        return jnp.zeros((rows, hp), jnp.bfloat16).at[:w.shape[0], :w.shape[1]].set(
            w.astype(jnp.bfloat16))

    wl1 = pad_weight(params["wl1"], fp)
    wr1 = pad_weight(params["wr1"], fp)
    wl2 = pad_weight(params["wl2"], hp)
    wr2 = pad_weight(params["wr2"], hp)

    b1 = jnp.zeros((1, hp), jnp.float32).at[:, :nhid].set(
        params["b1"].astype(jnp.float32))
    b1 = b1.at[0, hp - 1].set(1.0)     # relu(0+0+1)=1 plants h1's ones column for layer 2
    b2 = jnp.zeros((1, hp), jnp.float32).at[:, :nhid].set(
        params["b2"].astype(jnp.float32))

    h1 = _sage_layer(adj_t, x_p, wl1, wr1, b1, tm=tm, tk=tk,
                     out_dtype=jnp.bfloat16, resident=fits_resident(fp),
                     vmem_limit=vmem_limit)
    # TODO(synk): F.dropout only matters in training mode; identity here (eval).
    h2 = _sage_layer(adj_t, h1, wl2, wr2, b2, tm=tm, tk=tk,
                     out_dtype=jnp.float32, resident=fits_resident(hp),
                     vmem_limit=vmem_limit)

    # output = zeros(pad_n, nhid); output[pos_idx] = h2[:N, :nhid]
    # TODO(synk): scatter could be fused via scalar-prefetched pos_idx in an output
    # index_map + input_output_aliases; kept in JAX glue (modest win at these sizes).
    output = jnp.zeros((pad_n, nhid), jnp.float32).at[pos_idx].set(h2[:n, :nhid])
    return output


def _reference(x, adj, pad_n, pos_idx, p):
    a = (adj != 0).astype(jnp.float32).T
    deg = a.sum(-1, keepdims=True)
    inv = jnp.where(deg > 0, 1.0 / deg, 0.0)
    h1 = jnp.maximum((a @ x) * inv @ p["wl1"] + p["b1"] + x @ p["wr1"], 0.0)
    h2 = jnp.maximum((a @ h1) * inv @ p["wl2"] + p["b2"] + h1 @ p["wr2"], 0.0)
    return jnp.zeros((pad_n, h2.shape[1]), jnp.float32).at[pos_idx].set(h2)


if __name__ == "__main__":
    N, nfeat, nhid, pad_n = 8, 16, 32, 12

    key = jax.random.PRNGKey(0)
    kx, ka, k1, k2, k3, k4 = jax.random.split(key, 6)

    x = jax.random.normal(kx, (N, nfeat), jnp.float32)
    adj = (jax.random.uniform(ka, (N, N)) > 0.6).astype(jnp.float32)
    pos_idx = jnp.array([0, 2, 3, 5, 6, 8, 10, 11], jnp.int32)  # N entries < pad_n

    # deterministic parameter init (weights stored pre-transposed: [in, out])
    params = {
        "wl1": jax.random.normal(k1, (nfeat, nhid), jnp.float32) * 0.1,
        "wr1": jax.random.normal(k2, (nfeat, nhid), jnp.float32) * 0.1,
        "b1":  jnp.zeros((1, nhid), jnp.float32),
        "wl2": jax.random.normal(k3, (nhid, nhid), jnp.float32) * 0.1,
        "wr2": jax.random.normal(k4, (nhid, nhid), jnp.float32) * 0.1,
        "b2":  jnp.zeros((1, nhid), jnp.float32),
    }

    out = sage_encoder_forward(x, adj, pad_n, pos_idx, params)
    out = jax.block_until_ready(out)

    ref = _reference(x, adj, pad_n, pos_idx, params)
    assert out.shape == (pad_n, nhid)
    # bf16 features / weights / aggregation operands (f32 accumulation) -> loose tol.
    assert jnp.allclose(out, ref, atol=3e-2, rtol=3e-2)
    print("KERNEL_OK")
</pallas_src>

<mosaic_0001>
module attributes {stable_mosaic.version = 11 : i64} {
  func.func @_sage_layer_kernel(%arg0: i32, %arg1: i32, %arg2: memref<128x128xi8, #tpu.memory_space<vmem>>, %arg3: memref<128x128xbf16, #tpu.memory_space<vmem>>, %arg4: memref<128x128xbf16, #tpu.memory_space<vmem>>, %arg5: memref<128x128xbf16, #tpu.memory_space<vmem>>, %arg6: memref<128x128xbf16, #tpu.memory_space<vmem>>, %arg7: memref<1x128xf32, #tpu.memory_space<vmem>>, %arg8: memref<128x128xbf16, #tpu.memory_space<vmem>>, %arg9: memref<128x128xf32, #tpu.memory_space<vmem>>) attributes {dimension_semantics = [#tpu.dimension_semantics<parallel>, #tpu.dimension_semantics<arbitrary>], iteration_bounds = array<i64: 1, 1>, scalar_prefetch = 0 : i64, scratch_operands = 1 : i64, tpu.core_type = #tpu.core_type<tc>, window_params = [{transform_indices = @transform_0, window_bounds = array<i64: 128, 128>}, {pipeline_mode = #tpu.pipeline_mode<synchronous>, transform_indices = @transform_1, window_bounds = array<i64: 128, 128>}, {transform_indices = @transform_2, window_bounds = array<i64: 128, 128>}, {pipeline_mode = #tpu.pipeline_mode<synchronous>, transform_indices = @transform_3, window_bounds = array<i64: 128, 128>}, {pipeline_mode = #tpu.pipeline_mode<synchronous>, transform_indices = @transform_4, window_bounds = array<i64: 128, 128>}, {pipeline_mode = #tpu.pipeline_mode<synchronous>, transform_indices = @transform_5, window_bounds = array<i64: 1, 128>}, {transform_indices = @transform_6, window_bounds = array<i64: 128, 128>}]} {
    %c0_i32 = arith.constant 0 : i32
    %0 = arith.cmpi eq, %arg1, %c0_i32 : i32
    %1 = arith.extui %0 : i1 to i32
    %c0_i32_0 = arith.constant 0 : i32
    %2 = arith.cmpi ne, %1, %c0_i32_0 : i32
    scf.if %2 {
      %cst_9 = arith.constant 0.000000e+00 : f32
      %16 = vector.broadcast %cst_9 : f32 to vector<128x128xf32>
      %c0_10 = arith.constant 0 : index
      %c0_11 = arith.constant 0 : index
      %17 = vector.load %arg9[%c0_10, %c0_11] : memref<128x128xf32, #tpu.memory_space<vmem>>, vector<128x128xf32>
      tpu.vector_store %arg9[%c0_10, %c0_11], %16 {strides = array<i32>} : memref<128x128xf32, #tpu.memory_space<vmem>>, vector<128x128xf32>,
    } else {
    }
    %c0 = arith.constant 0 : index
    %c0_1 = arith.constant 0 : index
    %3 = vector.load %arg2[%c0, %c0_1] : memref<128x128xi8, #tpu.memory_space<vmem>>, vector<128x128xi8>
    %4 = arith.sitofp %3 : vector<128x128xi8> to vector<128x128xbf16>
    %c128_i32 = arith.constant 128 : i32
    %5 = arith.muli %arg1, %c128_i32 : i32
    %6 = tpu.assume_multiple %5, 128 : i32
    %7 = arith.index_cast %6 : i32 to index
    %c0_2 = arith.constant 0 : index
    %8 = vector.load %arg3[%7, %c0_2] : memref<128x128xbf16, #tpu.memory_space<vmem>>, vector<128x128xbf16>
    %c0_3 = arith.constant 0 : index
    %c0_4 = arith.constant 0 : index
    %9 = vector.load %arg9[%c0_3, %c0_4] : memref<128x128xf32, #tpu.memory_space<vmem>>, vector<128x128xf32>
    %cst = arith.constant dense<0.000000e+00> : vector<128x128xf32>
    %10 = tpu.matmul %4, %8, %cst {dimension_numbers = #tpu.dot_dimension_numbers<[1], [0], [0], [1], [0, 0, 1, 1], [], []>} : vector<128x128xbf16>, vector<128x128xbf16>, vector<128x128xf32> -> vector<128x128xf32>
    %11 = arith.addf %9, %10 : vector<128x128xf32>
    %c0_5 = arith.constant 0 : index
    %c0_6 = arith.constant 0 : index
    %12 = vector.load %arg9[%c0_5, %c0_6] : memref<128x128xf32, #tpu.memory_space<vmem>>, vector<128x128xf32>
    tpu.vector_store %arg9[%c0_5, %c0_6], %11 {strides = array<i32>} : memref<128x128xf32, #tpu.memory_space<vmem>>, vector<128x128xf32>,
    %c0_i32_7 = arith.constant 0 : i32
    %13 = arith.cmpi eq, %arg1, %c0_i32_7 : i32
    %14 = arith.extui %13 : i1 to i32
    %c0_i32_8 = arith.constant 0 : i32
    %15 = arith.cmpi ne, %14, %c0_i32_8 : i32
    scf.if %15 {
      %c0_9 = arith.constant 0 : index
      %c0_10 = arith.constant 0 : index
      %16 = vector.load %arg9[%c0_9, %c0_10] : memref<128x128xf32, #tpu.memory_space<vmem>>, vector<128x128xf32>
      %17 = vector.extract_strided_slice %16 {offsets = [0, 127], sizes = [128, 1], strides = [1, 1]} : vector<128x128xf32> to vector<128x1xf32>
      %cst_11 = arith.constant 0.000000e+00 : f32
      %18 = vector.broadcast %cst_11 : f32 to vector<128x1xf32>
      %19 = arith.cmpf ogt, %17, %18 : vector<128x1xf32>
      %20 = tpu.reciprocal %17 {approx = true} : vector<128x1xf32> -> vector<128x1xf32>
      %cst_12 = arith.constant 0.000000e+00 : f32
      %21 = vector.broadcast %cst_12 : f32 to vector<128x1xf32>
      %22 = arith.select %19, %20, %21 : vector<128x1xi1>, vector<128x1xf32>
      %23 = vector.broadcast %22 : vector<128x1xf32> to vector<128x128xf32>
      %24 = arith.mulf %16, %23 : vector<128x128xf32>
      %25 = arith.truncf %24 : vector<128x128xf32> to vector<128x128xbf16>
      %c0_13 = arith.constant 0 : index
      %c0_14 = arith.constant 0 : index
      %26 = vector.load %arg5[%c0_13, %c0_14] : memref<128x128xbf16, #tpu.memory_space<vmem>>, vector<128x128xbf16>
      %cst_15 = arith.constant dense<0.000000e+00> : vector<128x128xf32>
      %27 = tpu.matmul %25, %26, %cst_15 {dimension_numbers = #tpu.dot_dimension_numbers<[1], [0], [0], [1], [0, 0, 1, 1], [], []>} : vector<128x128xbf16>, vector<128x128xbf16>, vector<128x128xf32> -> vector<128x128xf32>
      %c0_16 = arith.constant 0 : index
      %c0_17 = arith.constant 0 : index
      %28 = vector.load %arg4[%c0_16, %c0_17] : memref<128x128xbf16, #tpu.memory_space<vmem>>, vector<128x128xbf16>
      %c0_18 = arith.constant 0 : index
      %c0_19 = arith.constant 0 : index
      %29 = vector.load %arg6[%c0_18, %c0_19] : memref<128x128xbf16, #tpu.memory_space<vmem>>, vector<128x128xbf16>
      %cst_20 = arith.constant dense<0.000000e+00> : vector<128x128xf32>
      %30 = tpu.matmul %28, %29, %cst_20 {dimension_numbers = #tpu.dot_dimension_numbers<[1], [0], [0], [1], [0, 0, 1, 1], [], []>} : vector<128x128xbf16>, vector<128x128xbf16>, vector<128x128xf32> -> vector<128x128xf32>
      %31 = arith.addf %27, %30 : vector<128x128xf32>
      %c0_21 = arith.constant 0 : index
      %c0_22 = arith.constant 0 : index
      %32 = vector.load %arg7[%c0_21, %c0_22] : memref<1x128xf32, #tpu.memory_space<vmem>>, vector<1x128xf32>
      %33 = vector.broadcast %32 : vector<1x128xf32> to vector<128x128xf32>
      %34 = arith.addf %31, %33 : vector<128x128xf32>
      %cst_23 = arith.constant 0.000000e+00 : f32
      %35 = vector.broadcast %cst_23 : f32 to vector<128x128xf32>
      %36 = arith.maximumf %34, %35 : vector<128x128xf32>
      %37 = arith.truncf %36 : vector<128x128xf32> to vector<128x128xbf16>
      %c0_24 = arith.constant 0 : index
      %c0_25 = arith.constant 0 : index
      %38 = vector.load %arg8[%c0_24, %c0_25] : memref<128x128xbf16, #tpu.memory_space<vmem>>, vector<128x128xbf16>
      tpu.vector_store %arg8[%c0_24, %c0_25], %37 {strides = array<i32>} : memref<128x128xbf16, #tpu.memory_space<vmem>>, vector<128x128xbf16>,
    } else {
    }
    return
  }
  func.func @transform_0(%arg0: i32, %arg1: i32) -> (i32, i32) {
    %c0_i32 = arith.constant 0 : i32
    return %arg0, %arg1 : i32, i32
  }
  func.func @transform_1(%arg0: i32, %arg1: i32) -> (i32, i32) {
    %c0_i32 = arith.constant 0 : i32
    %c0_i32_0 = arith.constant 0 : i32
    %c0_i32_1 = arith.constant 0 : i32
    return %c0_i32, %c0_i32_0 : i32, i32
  }
  func.func @transform_2(%arg0: i32, %arg1: i32) -> (i32, i32) {
    %c0_i32 = arith.constant 0 : i32
    %c0_i32_0 = arith.constant 0 : i32
    return %arg0, %c0_i32 : i32, i32
  }
  func.func @transform_3(%arg0: i32, %arg1: i32) -> (i32, i32) {
    %c0_i32 = arith.constant 0 : i32
    %c0_i32_0 = arith.constant 0 : i32
    %c0_i32_1 = arith.constant 0 : i32
    return %c0_i32, %c0_i32_0 : i32, i32
  }
  func.func @transform_4(%arg0: i32, %arg1: i32) -> (i32, i32) {
    %c0_i32 = arith.constant 0 : i32
    %c0_i32_0 = arith.constant 0 : i32
    %c0_i32_1 = arith.constant 0 : i32
    return %c0_i32, %c0_i32_0 : i32, i32
  }
  func.func @transform_5(%arg0: i32, %arg1: i32) -> (i32, i32) {
    %c0_i32 = arith.constant 0 : i32
    %c0_i32_0 = arith.constant 0 : i32
    %c0_i32_1 = arith.constant 0 : i32
    return %c0_i32, %c0_i32_0 : i32, i32
  }
  func.func @transform_6(%arg0: i32, %arg1: i32) -> (i32, i32) {
    %c0_i32 = arith.constant 0 : i32
    %c0_i32_0 = arith.constant 0 : i32
    return %arg0, %c0_i32 : i32, i32
  }
}

</mosaic_0001>

<llo_original>
// kernel: tpu_custom_call.1
$region0: #{tpu_custom_call.1}
  #allocation0 [shape = 'u32[]', space=smem, size = 0x4, offset = 0x4, fixed_abs, tag = 'smem constant byte address 0x4 - core index']
  #allocation1 [shape = 'u32[144,128]{1,0:T(1,128)}', space=vmem, size = 0x12000, scoped, tag = 'internal scratch']
  #allocation2 [shape = 'f32[128,128]{1,0:T(8,128)}', space=vmem, size = 0x10000, scoped, tag = 'scratch operand']
  %s0 = inlined_call_operand.hbm [shape: s8[128,128], index: 0, kind: input, shape index: {}]
  %s1 = inlined_call_operand.hbm [shape: bf16[128,128], index: 1, kind: input, shape index: {}]
  %s2 = inlined_call_operand.hbm [shape: bf16[128,128], index: 2, kind: input, shape index: {}]
  %s3 = inlined_call_operand.hbm [shape: bf16[128,128], index: 3, kind: input, shape index: {}]
  %s4 = inlined_call_operand.hbm [shape: bf16[128,128], index: 4, kind: input, shape index: {}]
  %s5 = inlined_call_operand.vmem [shape: f32[1,128], index: 5, kind: input, shape index: {}]
  %s6 = inlined_call_operand.hbm [shape: bf16[128,128], index: 6, kind: output, shape index: {}]
  %s7 = sld [smem:[#allocation0]]
  $region62: #{tpu_custom_call.1} parent=0
    _
  %s9 = ssub.s32 1, %s7
  %s10 = scalar_select 0, %s9, %s7
  $region1: #{tpu_custom_call.1} parent=0
    #allocation3 [shape = 'u8[16384]{0}', space=vmem, size = 0x4000, scoped, tag = 'input window, operand 0, single buffered']
    #allocation4 [shape = 's32[1]{0}', space=sflag, size = 0x4, scoped, tag = 'scoped memory for tpu_custom_call.1']
    #allocation5 [shape = 's32[1]{0}', space=sflag, size = 0x4, scoped, tag = 'scoped memory for tpu_custom_call.1']
    #allocation6 [shape = 'u8[32768]{0}', space=vmem, size = 0x8000, scoped, tag = 'input window, operand 1, single buffered']
    #allocation7 [shape = 's32[1]{0}', space=sflag, size = 0x4, scoped, tag = 'scoped memory for tpu_custom_call.1']
    #allocation8 [shape = 'u8[32768]{0}', space=vmem, size = 0x8000, scoped, tag = 'input window, operand 2, single buffered']
    #allocation9 [shape = 'u8[32768]{0}', space=vmem, size = 0x8000, scoped, tag = 'input window, operand 3, single buffered']
    #allocation10 [shape = 's32[1]{0}', space=sflag, size = 0x4, scoped, tag = 'scoped memory for tpu_custom_call.1']
    #allocation11 [shape = 'u8[32768]{0}', space=vmem, size = 0x8000, scoped, tag = 'input window, operand 4, single buffered']
    #allocation12 [shape = 'u8[32768]{0}', space=vmem, size = 0x8000, scoped, tag = 'output window, operand 0, single buffered']
    %11 = vsyncpa [#allocation4], 0
    %12 = vsyncpa [#allocation7], 0
    %13 = vsyncpa [#allocation10], 0
    %14 = vsyncpa [#allocation5], 0
    // Predicated region
    $region2: #{tpu_custom_call.1} parent=1 // pred_check
      _
    $region3: #{tpu_custom_call.1} parent=1 // pred_check_branch
      %16 = sbr.rel (0) target = $region5
    $region4: #{tpu_custom_call.1} parent=1 // pred_region
      %s18 = ssub.s32 512, 512
      %19 = vsyncadd [#allocation4], %s18
      %s20 = sshll.u32 [#allocation3], 4
      %s21 = int_to_ptr.vmem [resolvable:$true] %s20
      %26 = dma.hbm_to_vmem [thread:$0]  %s0, 512, %s21, [#allocation4], 128, 128, 8
    $region5: #{tpu_custom_call.1} parent=1 // pred_fallthru
      _
    // Predicated region
    $region6: #{tpu_custom_call.1} parent=1 // pred_check
      _
    $region7: #{tpu_custom_call.1} parent=1 // pred_check_branch
      %28 = sbr.rel (0) target = $region9
    $region8: #{tpu_custom_call.1} parent=1 // pred_region
      %s30 = ssub.s32 1024, 1024
      %31 = vsyncadd [#allocation7], %s30
      %s32 = sshll.u32 [#allocation6], 4
      %s33 = int_to_ptr.vmem [resolvable:$true] %s32
      %38 = dma.hbm_to_vmem [thread:$0]  %s1, 1024, %s33, [#allocation7], 64, 64, 4
    $region9: #{tpu_custom_call.1} parent=1 // pred_fallthru
      _
    // Predicated region
    $region10: #{tpu_custom_call.1} parent=1 // pred_check
      _
    $region11: #{tpu_custom_call.1} parent=1 // pred_check_branch
      %40 = sbr.rel (0) target = $region13
    $region12: #{tpu_custom_call.1} parent=1 // pred_region
      %s42 = ssub.s32 1024, 1024
      %43 = vsyncadd [#allocation7], %s42
      %s44 = sshll.u32 [#allocation8], 4
      %s45 = int_to_ptr.vmem [resolvable:$true] %s44
      %50 = dma.hbm_to_vmem [thread:$0]  %s2, 1024, %s45, [#allocation7], 64, 64, 4
    $region13: #{tpu_custom_call.1} parent=1 // pred_fallthru
      _
    // Predicated region
    $region14: #{tpu_custom_call.1} parent=1 // pred_check
      _
    $region15: #{tpu_custom_call.1} parent=1 // pred_check_branch
      %52 = sbr.rel (0) target = $region17
    $region16: #{tpu_custom_call.1} parent=1 // pred_region
      %s54 = ssub.s32 1024, 1024
      %55 = vsyncadd [#allocation10], %s54
      %s56 = sshll.u32 [#allocation9], 4
      %s57 = int_to_ptr.vmem [resolvable:$true] %s56
      %62 = dma.hbm_to_vmem [thread:$0]  %s3, 1024, %s57, [#allocation10], 64, 64, 4
    $region17: #{tpu_custom_call.1} parent=1 // pred_fallthru
      _
    // Predicated region
    $region18: #{tpu_custom_call.1} parent=1 // pred_check
      _
    $region19: #{tpu_custom_call.1} parent=1 // pred_check_branch
      %64 = sbr.rel (0) target = $region21
    $region20: #{tpu_custom_call.1} parent=1 // pred_region
      %s66 = ssub.s32 1024, 1024
      %67 = vsyncadd [#allocation10], %s66
      %s68 = sshll.u32 [#allocation11], 4
      %s69 = int_to_ptr.vmem [resolvable:$true] %s68
      %74 = dma.hbm_to_vmem [thread:$0]  %s4, 1024, %s69, [#allocation10], 64, 64, 4
    $region21: #{tpu_custom_call.1} parent=1 // pred_fallthru
      _
    // Predicated region
    $region22: #{tpu_custom_call.1} parent=1 // pred_check
      _
    $region23: #{tpu_custom_call.1} parent=1 // pred_check_branch
      %76 = sbr.rel (0) target = $region25
    $region24: #{tpu_custom_call.1} parent=1 // pred_region
      _
    $region25: #{tpu_custom_call.1} parent=1 // pred_fallthru
      _
    // Predicated region
    $region26: #{tpu_custom_call.1} parent=1 // pred_check
      _
    $region27: #{tpu_custom_call.1} parent=1 // pred_check_branch
      %78 = sbr.rel (0) target = $region29
    $region28: #{tpu_custom_call.1} parent=1 // pred_region
      %79 = dma.done [#allocation4], 512
    $region29: #{tpu_custom_call.1} parent=1 // pred_fallthru
      _
    // Predicated region
    $region30: #{tpu_custom_call.1} parent=1 // pred_check
      _
    $region31: #{tpu_custom_call.1} parent=1 // pred_check_branch
      %81 = sbr.rel (0) target = $region33
    $region32: #{tpu_custom_call.1} parent=1 // pred_region
      %82 = dma.done [#allocation7], 1024
    $region33: #{tpu_custom_call.1} parent=1 // pred_fallthru
      _
    // Predicated region
    $region34: #{tpu_custom_call.1} parent=1 // pred_check
      _
    $region35: #{tpu_custom_call.1} parent=1 // pred_check_branch
      %84 = sbr.rel (0) target = $region37
    $region36: #{tpu_custom_call.1} parent=1 // pred_region
      %85 = dma.done [#allocation7], 1024
    $region37: #{tpu_custom_call.1} parent=1 // pred_fallthru
      _
    // Predicated region
    $region38: #{tpu_custom_call.1} parent=1 // pred_check
      _
    $region39: #{tpu_custom_call.1} parent=1 // pred_check_branch
      %87 = sbr.rel (0) target = $region41
    $region40: #{tpu_custom_call.1} parent=1 // pred_region
      %88 = dma.done [#allocation10], 1024
    $region41: #{tpu_custom_call.1} parent=1 // pred_fallthru
      _
    // Predicated region
    $region42: #{tpu_custom_call.1} parent=1 // pred_check
      _
    $region43: #{tpu_custom_call.1} parent=1 // pred_check_branch
      %90 = sbr.rel (0) target = $region45
    $region44: #{tpu_custom_call.1} parent=1 // pred_region
      %91 = dma.done [#allocation10], 1024
    $region45: #{tpu_custom_call.1} parent=1 // pred_fallthru
      _
    %p93 = scmp.eq.s32.totalorder 0, 0
    // Predicated region
    $region46: #{tpu_custom_call.1} parent=1 // pred_check
      %p94 = pneg %p93
    $region47: #{tpu_custom_call.1} parent=1 // pred_check_branch
      %96 = sbr.rel (%p94) target = $region49
    $region48: #{tpu_custom_call.1} parent=1 // pred_region
      %97 = vst [vmem:[#allocation2] sm:$0xff] 0.0
      %98 = vst [vmem:[#allocation2 + $0x8] sm:$0xff] 0.0
      %99 = vst [vmem:[#allocation2 + $0x10] sm:$0xff] 0.0
      %100 = vst [vmem:[#allocation2 + $0x18] sm:$0xff] 0.0
      %101 = vst [vmem:[#allocation2 + $0x20] sm:$0xff] 0.0
      %102 = vst [vmem:[#allocation2 + $0x28] sm:$0xff] 0.0
      %103 = vst [vmem:[#allocation2 + $0x30] sm:$0xff] 0.0
      %104 = vst [vmem:[#allocation2 + $0x38] sm:$0xff] 0.0
      %105 = vst [vmem:[#allocation2 + $0x40] sm:$0xff] 0.0
      %106 = vst [vmem:[#allocation2 + $0x48] sm:$0xff] 0.0
      %107 = vst [vmem:[#allocation2 + $0x50] sm:$0xff] 0.0
      %108 = vst [vmem:[#allocation2 + $0x58] sm:$0xff] 0.0
      %109 = vst [vmem:[#allocation2 + $0x60] sm:$0xff] 0.0
      %110 = vst [vmem:[#allocation2 + $0x68] sm:$0xff] 0.0
      %111 = vst [vmem:[#allocation2 + $0x70] sm:$0xff] 0.0
      %112 = vst [vmem:[#allocation2 + $0x78] sm:$0xff] 0.0
    $region49: #{tpu_custom_call.1} parent=1 // pred_fallthru
      _
    %v113 = vld [vmem:[#allocation3] sm:$0xff]
    %v114 = vld [vmem:[#allocation3 + $0x8] sm:$0xff]
    %v115 = vld [vmem:[#allocation3 + $0x10] sm:$0xff]
    %v116 = vld [vmem:[#allocation3 + $0x18] sm:$0xff]
    %v117 = vunpack.c.l.s8.bf16 %v113
    %v118 = vunpack.c.h.s8.bf16 %v113
    %v119 = vunpack.c.l.s8.bf16 %v114
    %v120 = vunpack.c.h.s8.bf16 %v114
    %v121 = vunpack.c.l.s8.bf16 %v115
    %v122 = vunpack.c.h.s8.bf16 %v115
    %v123 = vunpack.c.l.s8.bf16 %v116
    %v124 = vunpack.c.h.s8.bf16 %v116
    %s125 = smul.u32 0, 128
    %s126 = sshra.s32 %s125, 3
    %s127 = sand.u32 %s125, 7
    %s128 = smul.addr %s126, 4
    %s129 = scalar_lea.vmem [#allocation6], %s128
    %v130 = vld [vmem:[%s129] sm:$0xf]
    %v131 = vld [vmem:[%s129 + $0x4] sm:$0xf]
    %v132 = vld [vmem:[%s129 + $0x8] sm:$0xf]
    %v133 = vld [vmem:[%s129 + $0xc] sm:$0xf]
    %v134 = vld [vmem:[%s129 + $0x10] sm:$0xf]
    %v135 = vld [vmem:[%s129 + $0x14] sm:$0xf]
    %v136 = vld [vmem:[%s129 + $0x18] sm:$0xf]
    %v137 = vld [vmem:[%s129 + $0x1c] sm:$0xf]
    %v138 = vld [vmem:[%s129 + $0x20] sm:$0xf]
    %v139 = vld [vmem:[%s129 + $0x24] sm:$0xf]
    %v140 = vld [vmem:[%s129 + $0x28] sm:$0xf]
    %v141 = vld [vmem:[%s129 + $0x2c] sm:$0xf]
    %v142 = vld [vmem:[%s129 + $0x30] sm:$0xf]
    %v143 = vld [vmem:[%s129 + $0x34] sm:$0xf]
    %v144 = vld [vmem:[%s129 + $0x38] sm:$0xf]
    %v145 = vld [vmem:[%s129 + $0x3c] sm:$0xf]
    %v146 = vld [vmem:[#allocation2] sm:$0xff]
    %v147 = vld [vmem:[#allocation2 + $0x8] sm:$0xff]
    %v148 = vld [vmem:[#allocation2 + $0x10] sm:$0xff]
    %v149 = vld [vmem:[#allocation2 + $0x18] sm:$0xff]
    %v150 = vld [vmem:[#allocation2 + $0x20] sm:$0xff]
    %v151 = vld [vmem:[#allocation2 + $0x28] sm:$0xff]
    %v152 = vld [vmem:[#allocation2 + $0x30] sm:$0xff]
    %v153 = vld [vmem:[#allocation2 + $0x38] sm:$0xff]
    %v154 = vld [vmem:[#allocation2 + $0x40] sm:$0xff]
    %v155 = vld [vmem:[#allocation2 + $0x48] sm:$0xff]
    %v156 = vld [vmem:[#allocation2 + $0x50] sm:$0xff]
    %v157 = vld [vmem:[#allocation2 + $0x58] sm:$0xff]
    %v158 = vld [vmem:[#allocation2 + $0x60] sm:$0xff]
    %v159 = vld [vmem:[#allocation2 + $0x68] sm:$0xff]
    %v160 = vld [vmem:[#allocation2 + $0x70] sm:$0xff]
    %v161 = vld [vmem:[#allocation2 + $0x78] sm:$0xff]
    %v178 = vunpack.c.l.b16 %v130
    %v179 = vunpack.c.l.b16 %v131
    %v180 = vunpack.c.l.b16 %v132
    %v181 = vunpack.c.l.b16 %v133
    %v182 = vunpack.c.l.b16 %v134
    %v183 = vunpack.c.l.b16 %v135
    %v184 = vunpack.c.l.b16 %v136
    %v185 = vunpack.c.l.b16 %v137
    %v186 = vunpack.c.l.b16 %v138
    %v187 = vunpack.c.l.b16 %v139
    %v188 = vunpack.c.l.b16 %v140
    %v189 = vunpack.c.l.b16 %v141
    %v190 = vunpack.c.l.b16 %v142
    %v191 = vunpack.c.l.b16 %v143
    %v192 = vunpack.c.l.b16 %v144
    %v193 = vunpack.c.l.b16 %v145
    %v194 = vpack.c.b16 %v179, %v178
    %v195 = vpack.c.b16 %v181, %v180
    %v196 = vpack.c.b16 %v183, %v182
    %v197 = vpack.c.b16 %v185, %v184
    %v198 = vpack.c.b16 %v187, %v186
    %v199 = vpack.c.b16 %v189, %v188
    %v200 = vpack.c.b16 %v191, %v190
    %v201 = vpack.c.b16 %v193, %v192
    %210 = vmatprep.subr.bf16.mxu0 0
    %211 = vmatpush1.bf16.msra.mxu0 %v194
    %212 = vmatprep.subr.bf16.mxu0 0
    %213 = vmatpush1.bf16.msra.mxu0 %v195
    %214 = vmatprep.subr.bf16.mxu0 0
    %215 = vmatpush1.bf16.msra.mxu0 %v196
    %216 = vmatprep.subr.bf16.mxu0 0
    %217 = vmatpush1.bf16.msra.mxu0 %v197
    %218 = vmatprep.subr.bf16.mxu0 0
    %219 = vmatpush1.bf16.msra.mxu0 %v198
    %220 = vmatprep.subr.bf16.mxu0 0
    %221 = vmatpush1.bf16.msra.mxu0 %v199
    %222 = vmatprep.subr.bf16.mxu0 0
    %223 = vmatpush1.bf16.msra.mxu0 %v200
    %224 = vmatprep.subr.bf16.mxu0 0
    %225 = vmatpush1.bf16.msra.mxu0 %v201
    %226 = vmatprep.subr.bf16.mxu0 0
    %227 = vmatpush1.bf16.msra.mxu0 0
    %228 = vmatprep.subr.bf16.mxu0 0
    %229 = vmatpush1.bf16.msra.mxu0 0
    %230 = vmatprep.subr.bf16.mxu0 0
    %231 = vmatpush1.bf16.msra.mxu0 0
    %232 = vmatprep.subr.bf16.mxu0 0
    %233 = vmatpush1.bf16.msra.mxu0 0
    %234 = vmatprep.subr.bf16.mxu0 0
    %235 = vmatpush1.bf16.msra.mxu0 0
    %236 = vmatprep.subr.bf16.mxu0 0
    %237 = vmatpush1.bf16.msra.mxu0 0
    %238 = vmatprep.subr.bf16.mxu0 0
    %239 = vmatpush1.bf16.msra.mxu0 0
    %240 = vmatprep.subr.bf16.mxu0 0
    %241 = vmatpush1.bf16.msra.mxu0 0
    %242 = vmatprep.mubr.bf16.mxu0 0
    %243 = vmatmul.mubr.bf16.gmra.mrb[0].mxu0 %v117
    %v244 = vpop.f32.mrb[0].mxu0
    %v245 = vadd.f32 0.0, %v244
    %v246 = vpop.f32.mrb[0].mxu0
    %v247 = vpop.f32.mrb[0].mxu0
    %v248 = vadd.f32 0.0, %v247
    %v249 = vpop.f32.mrb[0].mxu0
    %250 = vmatprep.mubr.bf16.mxu0 0
    %251 = vmatmul.mubr.bf16.gmra.mrb[0].mxu0 %v118
    %v252 = vpop.f32.mrb[0].mxu0
    %v253 = vadd.f32 0.0, %v252
    %v254 = vpop.f32.mrb[0].mxu0
    %v255 = vpop.f32.mrb[0].mxu0
    %v256 = vadd.f32 0.0, %v255
    %v257 = vpop.f32.mrb[0].mxu0
    %258 = vmatprep.mubr.bf16.mxu0 0
    %259 = vmatmul.mubr.bf16.gmra.mrb[0].mxu0 %v119
    %v260 = vpop.f32.mrb[0].mxu0
    %v261 = vadd.f32 0.0, %v260
    %v262 = vpop.f32.mrb[0].mxu0
    %v263 = vpop.f32.mrb[0].mxu0
    %v264 = vadd.f32 0.0, %v263
    %v265 = vpop.f32.mrb[0].mxu0
    %266 = vmatprep.mubr.bf16.mxu0 0
    %267 = vmatmul.mubr.bf16.gmra.mrb[0].mxu0 %v120
    %v268 = vpop.f32.mrb[0].mxu0
    %v269 = vadd.f32 0.0, %v268
    %v270 = vpop.f32.mrb[0].mxu0
    %v271 = vpop.f32.mrb[0].mxu0
    %v272 = vadd.f32 0.0, %v271
    %v273 = vpop.f32.mrb[0].mxu0
    %274 = vmatprep.mubr.bf16.mxu0 0
    %275 = vmatmul.mubr.bf16.gmra.mrb[0].mxu0 %v121
    %v276 = vpop.f32.mrb[0].mxu0
    %v277 = vadd.f32 0.0, %v276
    %v278 = vpop.f32.mrb[0].mxu0
    %v279 = vpop.f32.mrb[0].mxu0
    %v280 = vadd.f32 0.0, %v279
    %v281 = vpop.f32.mrb[0].mxu0
    %282 = vmatprep.mubr.bf16.mxu0 0
    %283 = vmatmul.mubr.bf16.gmra.mrb[0].mxu0 %v122
    %v284 = vpop.f32.mrb[0].mxu0
    %v285 = vadd.f32 0.0, %v284
    %v286 = vpop.f32.mrb[0].mxu0
    %v287 = vpop.f32.mrb[0].mxu0
    %v288 = vadd.f32 0.0, %v287
    %v289 = vpop.f32.mrb[0].mxu0
    %290 = vmatprep.mubr.bf16.mxu0 0
    %291 = vmatmul.mubr.bf16.gmra.mrb[0].mxu0 %v123
    %v292 = vpop.f32.mrb[0].mxu0
    %v293 = vadd.f32 0.0, %v292
    %v294 = vpop.f32.mrb[0].mxu0
    %v295 = vpop.f32.mrb[0].mxu0
    %v296 = vadd.f32 0.0, %v295
    %v297 = vpop.f32.mrb[0].mxu0
    %298 = vmatprep.mubr.bf16.mxu0 0
    %299 = vmatmul.mubr.bf16.gmra.mrb[0].mxu0 %v124
    %v300 = vpop.f32.mrb[0].mxu0
    %v301 = vadd.f32 0.0, %v300
    %v302 = vpop.f32.mrb[0].mxu0
    %v303 = vpop.f32.mrb[0].mxu0
    %v304 = vadd.f32 0.0, %v303
    %v305 = vpop.f32.mrb[0].mxu0
    %306 = vdwg.mxu0
    %v307 = vadd.f32 %v146, %v245
    %v308 = vadd.f32 %v147, %v248
    %v309 = vadd.f32 %v148, %v253
    %v310 = vadd.f32 %v149, %v256
    %v311 = vadd.f32 %v150, %v261
    %v312 = vadd.f32 %v151, %v264
    %v313 = vadd.f32 %v152, %v269
    %v314 = vadd.f32 %v153, %v272
    %v315 = vadd.f32 %v154, %v277
    %v316 = vadd.f32 %v155, %v280
    %v317 = vadd.f32 %v156, %v285
    %v318 = vadd.f32 %v157, %v288
    %v319 = vadd.f32 %v158, %v293
    %v320 = vadd.f32 %v159, %v296
    %v321 = vadd.f32 %v160, %v301
    %v322 = vadd.f32 %v161, %v304
    %323 = vst [vmem:[#allocation2] sm:$0xff] %v307
    %324 = vst [vmem:[#allocation2 + $0x8] sm:$0xff] %v308
    %325 = vst [vmem:[#allocation2 + $0x10] sm:$0xff] %v309
    %326 = vst [vmem:[#allocation2 + $0x18] sm:$0xff] %v310
    %327 = vst [vmem:[#allocation2 + $0x20] sm:$0xff] %v311
    %328 = vst [vmem:[#allocation2 + $0x28] sm:$0xff] %v312
    %329 = vst [vmem:[#allocation2 + $0x30] sm:$0xff] %v313
    %330 = vst [vmem:[#allocation2 + $0x38] sm:$0xff] %v314
    %331 = vst [vmem:[#allocation2 + $0x40] sm:$0xff] %v315
    %332 = vst [vmem:[#allocation2 + $0x48] sm:$0xff] %v316
    %333 = vst [vmem:[#allocation2 + $0x50] sm:$0xff] %v317
    %334 = vst [vmem:[#allocation2 + $0x58] sm:$0xff] %v318
    %335 = vst [vmem:[#allocation2 + $0x60] sm:$0xff] %v319
    %336 = vst [vmem:[#allocation2 + $0x68] sm:$0xff] %v320
    %337 = vst [vmem:[#allocation2 + $0x70] sm:$0xff] %v321
    %338 = vst [vmem:[#allocation2 + $0x78] sm:$0xff] %v322
    // Predicated region
    $region50: #{tpu_custom_call.1} parent=1 // pred_check
      %p339 = pneg %p93
    $region51: #{tpu_custom_call.1} parent=1 // pred_check_branch
      %341 = sbr.rel (%p339) target = $region53
    $region52: #{tpu_custom_call.1} parent=1 // pred_region
      %v342 = vld [vmem:[#allocation2] sm:$0xff]
      %v343 = vld [vmem:[#allocation2 + $0x8] sm:$0xff]
      %v344 = vld [vmem:[#allocation2 + $0x10] sm:$0xff]
      %v345 = vld [vmem:[#allocation2 + $0x18] sm:$0xff]
      %v346 = vld [vmem:[#allocation2 + $0x20] sm:$0xff]
      %v347 = vld [vmem:[#allocation2 + $0x28] sm:$0xff]
      %v348 = vld [vmem:[#allocation2 + $0x30] sm:$0xff]
      %v349 = vld [vmem:[#allocation2 + $0x38] sm:$0xff]
      %v350 = vld [vmem:[#allocation2 + $0x40] sm:$0xff]
      %v351 = vld [vmem:[#allocation2 + $0x48] sm:$0xff]
      %v352 = vld [vmem:[#allocation2 + $0x50] sm:$0xff]
      %v353 = vld [vmem:[#allocation2 + $0x58] sm:$0xff]
      %v354 = vld [vmem:[#allocation2 + $0x60] sm:$0xff]
      %v355 = vld [vmem:[#allocation2 + $0x68] sm:$0xff]
      %v356 = vld [vmem:[#allocation2 + $0x70] sm:$0xff]
      %v357 = vld [vmem:[#allocation2 + $0x78] sm:$0xff]
      %vm358 = vcmp.gt.f32.partialorder %v342, 0.0
      %vm359 = vcmp.gt.f32.partialorder %v343, 0.0
      %vm360 = vcmp.gt.f32.partialorder %v344, 0.0
      %vm361 = vcmp.gt.f32.partialorder %v345, 0.0
      %vm362 = vcmp.gt.f32.partialorder %v346, 0.0
      %vm363 = vcmp.gt.f32.partialorder %v347, 0.0
      %vm364 = vcmp.gt.f32.partialorder %v348, 0.0
      %vm365 = vcmp.gt.f32.partialorder %v349, 0.0
      %vm366 = vcmp.gt.f32.partialorder %v350, 0.0
      %vm367 = vcmp.gt.f32.partialorder %v351, 0.0
      %vm368 = vcmp.gt.f32.partialorder %v352, 0.0
      %vm369 = vcmp.gt.f32.partialorder %v353, 0.0
      %vm370 = vcmp.gt.f32.partialorder %v354, 0.0
      %vm371 = vcmp.gt.f32.partialorder %v355, 0.0
      %vm372 = vcmp.gt.f32.partialorder %v356, 0.0
      %vm373 = vcmp.gt.f32.partialorder %v357, 0.0
      %v374 = vrcp.pop %v342
      %v375 = vrcp.pop %v343
      %v376 = vrcp.pop %v344
      %v377 = vrcp.pop %v345
      %v378 = vrcp.pop %v346
      %v379 = vrcp.pop %v347
      %v380 = vrcp.pop %v348
      %v381 = vrcp.pop %v349
      %v382 = vrcp.pop %v350
      %v383 = vrcp.pop %v351
      %v384 = vrcp.pop %v352
      %v385 = vrcp.pop %v353
      %v386 = vrcp.pop %v354
      %v387 = vrcp.pop %v355
      %v388 = vrcp.pop %v356
      %v389 = vrcp.pop %v357
      %v390 = vsel %vm358, %v374, 0.0
      %v391 = vsel %vm359, %v375, 0.0
      %v392 = vsel %vm360, %v376, 0.0
      %v393 = vsel %vm361, %v377, 0.0
      %v394 = vsel %vm362, %v378, 0.0
      %v395 = vsel %vm363, %v379, 0.0
      %v396 = vsel %vm364, %v380, 0.0
      %v397 = vsel %vm365, %v381, 0.0
      %v398 = vsel %vm366, %v382, 0.0
      %v399 = vsel %vm367, %v383, 0.0
      %v400 = vsel %vm368, %v384, 0.0
      %v401 = vsel %vm369, %v385, 0.0
      %v402 = vsel %vm370, %v386, 0.0
      %v403 = vsel %vm371, %v387, 0.0
      %v404 = vsel %vm372, %v388, 0.0
      %v405 = vsel %vm373, %v389, 0.0
      %407 = vset.pattern.permute.xlu0 127
      %408 = vperm.xlu0 %407, %v390
      %v409 = vpop.permute.xlu0 %408
      %412 = vset.pattern.permute.xlu0 127
      %413 = vperm.xlu0 %412, %v391
      %v414 = vpop.permute.xlu0 %413
      %417 = vset.pattern.permute.xlu0 127
      %418 = vperm.xlu0 %417, %v392
      %v419 = vpop.permute.xlu0 %418
      %422 = vset.pattern.permute.xlu0 127
      %423 = vperm.xlu0 %422, %v393
      %v424 = vpop.permute.xlu0 %423
      %427 = vset.pattern.permute.xlu0 127
      %428 = vperm.xlu0 %427, %v394
      %v429 = vpop.permute.xlu0 %428
      %432 = vset.pattern.permute.xlu0 127
      %433 = vperm.xlu0 %432, %v395
      %v434 = vpop.permute.xlu0 %433
      %437 = vset.pattern.permute.xlu0 127
      %438 = vperm.xlu0 %437, %v396
      %v439 = vpop.permute.xlu0 %438
      %442 = vset.pattern.permute.xlu0 127
      %443 = vperm.xlu0 %442, %v397
      %v444 = vpop.permute.xlu0 %443
      %447 = vset.pattern.permute.xlu0 127
      %448 = vperm.xlu0 %447, %v398
      %v449 = vpop.permute.xlu0 %448
      %452 = vset.pattern.permute.xlu0 127
      %453 = vperm.xlu0 %452, %v399
      %v454 = vpop.permute.xlu0 %453
      %457 = vset.pattern.permute.xlu0 127
      %458 = vperm.xlu0 %457, %v400
      %v459 = vpop.permute.xlu0 %458
      %462 = vset.pattern.permute.xlu0 127
      %463 = vperm.xlu0 %462, %v401
      %v464 = vpop.permute.xlu0 %463
      %467 = vset.pattern.permute.xlu0 127
      %468 = vperm.xlu0 %467, %v402
      %v469 = vpop.permute.xlu0 %468
      %472 = vset.pattern.permute.xlu0 127
      %473 = vperm.xlu0 %472, %v403
      %v474 = vpop.permute.xlu0 %473
      %477 = vset.pattern.permute.xlu0 127
      %478 = vperm.xlu0 %477, %v404
      %v479 = vpop.permute.xlu0 %478
      %482 = vset.pattern.permute.xlu0 127
      %483 = vperm.xlu0 %482, %v405
      %v484 = vpop.permute.xlu0 %483
      %v486 = vmul.f32 %v342, %v409
      %v487 = vmul.f32 %v343, %v414
      %v488 = vmul.f32 %v344, %v419
      %v489 = vmul.f32 %v345, %v424
      %v490 = vmul.f32 %v346, %v429
      %v491 = vmul.f32 %v347, %v434
      %v492 = vmul.f32 %v348, %v439
      %v493 = vmul.f32 %v349, %v444
      %v494 = vmul.f32 %v350, %v449
      %v495 = vmul.f32 %v351, %v454
      %v496 = vmul.f32 %v352, %v459
      %v497 = vmul.f32 %v353, %v464
      %v498 = vmul.f32 %v354, %v469
      %v499 = vmul.f32 %v355, %v474
      %v500 = vmul.f32 %v356, %v479
      %v501 = vmul.f32 %v357, %v484
      %v502 = vpack.c.bf16 %v487, %v486
      %v503 = vpack.c.bf16 %v489, %v488
      %v504 = vpack.c.bf16 %v491, %v490
      %v505 = vpack.c.bf16 %v493, %v492
      %v506 = vpack.c.bf16 %v495, %v494
      %v507 = vpack.c.bf16 %v497, %v496
      %v508 = vpack.c.bf16 %v499, %v498
      %v509 = vpack.c.bf16 %v501, %v500
      %v510 = vld [vmem:[#allocation9] sm:$0xf]
      %v511 = vld [vmem:[#allocation9 + $0x4] sm:$0xf]
      %v512 = vld [vmem:[#allocation9 + $0x8] sm:$0xf]
      %v513 = vld [vmem:[#allocation9 + $0xc] sm:$0xf]
      %v514 = vld [vmem:[#allocation9 + $0x10] sm:$0xf]
      %v515 = vld [vmem:[#allocation9 + $0x14] sm:$0xf]
      %v516 = vld [vmem:[#allocation9 + $0x18] sm:$0xf]
      %v517 = vld [vmem:[#allocation9 + $0x1c] sm:$0xf]
      %v518 = vld [vmem:[#allocation9 + $0x20] sm:$0xf]
      %v519 = vld [vmem:[#allocation9 + $0x24] sm:$0xf]
      %v520 = vld [vmem:[#allocation9 + $0x28] sm:$0xf]
      %v521 = vld [vmem:[#allocation9 + $0x2c] sm:$0xf]
      %v522 = vld [vmem:[#allocation9 + $0x30] sm:$0xf]
      %v523 = vld [vmem:[#allocation9 + $0x34] sm:$0xf]
      %v524 = vld [vmem:[#allocation9 + $0x38] sm:$0xf]
      %v525 = vld [vmem:[#allocation9 + $0x3c] sm:$0xf]
      %v526 = vld [vmem:[#allocation8] sm:$0xf]
      %v527 = vld [vmem:[#allocation8 + $0x4] sm:$0xf]
      %v528 = vld [vmem:[#allocation8 + $0x8] sm:$0xf]
      %v529 = vld [vmem:[#allocation8 + $0xc] sm:$0xf]
      %v530 = vld [vmem:[#allocation8 + $0x10] sm:$0xf]
      %v531 = vld [vmem:[#allocation8 + $0x14] sm:$0xf]
      %v532 = vld [vmem:[#allocation8 + $0x18] sm:$0xf]
      %v533 = vld [vmem:[#allocation8 + $0x1c] sm:$0xf]
      %v534 = vld [vmem:[#allocation8 + $0x20] sm:$0xf]
      %v535 = vld [vmem:[#allocation8 + $0x24] sm:$0xf]
      %v536 = vld [vmem:[#allocation8 + $0x28] sm:$0xf]
      %v537 = vld [vmem:[#allocation8 + $0x2c] sm:$0xf]
      %v538 = vld [vmem:[#allocation8 + $0x30] sm:$0xf]
      %v539 = vld [vmem:[#allocation8 + $0x34] sm:$0xf]
      %v540 = vld [vmem:[#allocation8 + $0x38] sm:$0xf]
      %v541 = vld [vmem:[#allocation8 + $0x3c] sm:$0xf]
      %v542 = vld [vmem:[#allocation11] sm:$0xf]
      %v543 = vld [vmem:[#allocation11 + $0x4] sm:$0xf]
      %v544 = vld [vmem:[#allocation11 + $0x8] sm:$0xf]
      %v545 = vld [vmem:[#allocation11 + $0xc] sm:$0xf]
      %v546 = vld [vmem:[#allocation11 + $0x10] sm:$0xf]
      %v547 = vld [vmem:[#allocation11 + $0x14] sm:$0xf]
      %v548 = vld [vmem:[#allocation11 + $0x18] sm:$0xf]
      %v549 = vld [vmem:[#allocation11 + $0x1c] sm:$0xf]
      %v550 = vld [vmem:[#allocation11 + $0x20] sm:$0xf]
      %v551 = vld [vmem:[#allocation11 + $0x24] sm:$0xf]
      %v552 = vld [vmem:[#allocation11 + $0x28] sm:$0xf]
      %v553 = vld [vmem:[#allocation11 + $0x2c] sm:$0xf]
      %v554 = vld [vmem:[#allocation11 + $0x30] sm:$0xf]
      %v555 = vld [vmem:[#allocation11 + $0x34] sm:$0xf]
      %v556 = vld [vmem:[#allocation11 + $0x38] sm:$0xf]
      %v557 = vld [vmem:[#allocation11 + $0x3c] sm:$0xf]
      %v574 = vunpack.c.l.b16 %v526
      %v575 = vunpack.c.l.b16 %v527
      %v576 = vunpack.c.l.b16 %v528
      %v577 = vunpack.c.l.b16 %v529
      %v578 = vunpack.c.l.b16 %v530
      %v579 = vunpack.c.l.b16 %v531
      %v580 = vunpack.c.l.b16 %v532
      %v581 = vunpack.c.l.b16 %v533
      %v582 = vunpack.c.l.b16 %v534
      %v583 = vunpack.c.l.b16 %v535
      %v584 = vunpack.c.l.b16 %v536
      %v585 = vunpack.c.l.b16 %v537
      %v586 = vunpack.c.l.b16 %v538
      %v587 = vunpack.c.l.b16 %v539
      %v588 = vunpack.c.l.b16 %v540
      %v589 = vunpack.c.l.b16 %v541
      %v590 = vpack.c.b16 %v575, %v574
      %v591 = vpack.c.b16 %v577, %v576
      %v592 = vpack.c.b16 %v579, %v578
      %v593 = vpack.c.b16 %v581, %v580
      %v594 = vpack.c.b16 %v583, %v582
      %v595 = vpack.c.b16 %v585, %v584
      %v596 = vpack.c.b16 %v587, %v586
      %v597 = vpack.c.b16 %v589, %v588
      %v622 = vunpack.c.l.b16 %v542
      %v623 = vunpack.c.l.b16 %v543
      %v624 = vunpack.c.l.b16 %v544
      %v625 = vunpack.c.l.b16 %v545
      %v626 = vunpack.c.l.b16 %v546
      %v627 = vunpack.c.l.b16 %v547
      %v628 = vunpack.c.l.b16 %v548
      %v629 = vunpack.c.l.b16 %v549
      %v630 = vunpack.c.l.b16 %v550
      %v631 = vunpack.c.l.b16 %v551
      %v632 = vunpack.c.l.b16 %v552
      %v633 = vunpack.c.l.b16 %v553
      %v634 = vunpack.c.l.b16 %v554
      %v635 = vunpack.c.l.b16 %v555
      %v636 = vunpack.c.l.b16 %v556
      %v637 = vunpack.c.l.b16 %v557
      %v638 = vpack.c.b16 %v623, %v622
      %v639 = vpack.c.b16 %v625, %v624
      %v640 = vpack.c.b16 %v627, %v626
      %v641 = vpack.c.b16 %v629, %v628
      %v642 = vpack.c.b16 %v631, %v630
      %v643 = vpack.c.b16 %v633, %v632
      %v644 = vpack.c.b16 %v635, %v634
      %v645 = vpack.c.b16 %v637, %v636
      %654 = vmatprep.subr.bf16.mxu0 0
      %655 = vmatpush1.bf16.msra.mxu0 %v638
      %656 = vmatprep.subr.bf16.mxu0 0
      %657 = vmatpush1.bf16.msra.mxu0 %v639
      %658 = vmatprep.subr.bf16.mxu0 0
      %659 = vmatpush1.bf16.msra.mxu0 %v640
      %660 = vmatprep.subr.bf16.mxu0 0
      %661 = vmatpush1.bf16.msra.mxu0 %v641
      %662 = vmatprep.subr.bf16.mxu0 0
      %663 = vmatpush1.bf16.msra.mxu0 %v642
      %664 = vmatprep.subr.bf16.mxu0 0
      %665 = vmatpush1.bf16.msra.mxu0 %v643
      %666 = vmatprep.subr.bf16.mxu0 0
      %667 = vmatpush1.bf16.msra.mxu0 %v644
      %668 = vmatprep.subr.bf16.mxu0 0
      %669 = vmatpush1.bf16.msra.mxu0 %v645
      %670 = vmatprep.subr.bf16.mxu0 0
      %671 = vmatpush1.bf16.msra.mxu0 0
      %672 = vmatprep.subr.bf16.mxu0 0
      %673 = vmatpush1.bf16.msra.mxu0 0
      %674 = vmatprep.subr.bf16.mxu0 0
      %675 = vmatpush1.bf16.msra.mxu0 0
      %676 = vmatprep.subr.bf16.mxu0 0
      %677 = vmatpush1.bf16.msra.mxu0 0
      %678 = vmatprep.subr.bf16.mxu0 0
      %679 = vmatpush1.bf16.msra.mxu0 0
      %680 = vmatprep.subr.bf16.mxu0 0
      %681 = vmatpush1.bf16.msra.mxu0 0
      %682 = vmatprep.subr.bf16.mxu0 0
      %683 = vmatpush1.bf16.msra.mxu0 0
      %684 = vmatprep.subr.bf16.mxu0 0
      %685 = vmatpush1.bf16.msra.mxu0 0
      %686 = vmatprep.mubr.bf16.mxu0 0
      %687 = vmatmul.mubr.bf16.gmra.mrb[0].mxu0 %v590
      %v688 = vpop.f32.mrb[0].mxu0
      %v689 = vadd.f32 0.0, %v688
      %v690 = vpop.f32.mrb[0].mxu0
      %v691 = vpop.f32.mrb[0].mxu0
      %v692 = vadd.f32 0.0, %v691
      %v693 = vpop.f32.mrb[0].mxu0
      %694 = vmatprep.mubr.bf16.mxu0 0
      %695 = vmatmul.mubr.bf16.gmra.mrb[0].mxu0 %v591
      %v696 = vpop.f32.mrb[0].mxu0
      %v697 = vadd.f32 0.0, %v696
      %v698 = vpop.f32.mrb[0].mxu0
      %v699 = vpop.f32.mrb[0].mxu0
      %v700 = vadd.f32 0.0, %v699
      %v701 = vpop.f32.mrb[0].mxu0
      %702 = vmatprep.mubr.bf16.mxu0 0
      %703 = vmatmul.mubr.bf16.gmra.mrb[0].mxu0 %v592
      %v704 = vpop.f32.mrb[0].mxu0
      %v705 = vadd.f32 0.0, %v704
      %v706 = vpop.f32.mrb[0].mxu0
      %v707 = vpop.f32.mrb[0].mxu0
      %v708 = vadd.f32 0.0, %v707
      %v709 = vpop.f32.mrb[0].mxu0
      %710 = vmatprep.mubr.bf16.mxu0 0
      %711 = vmatmul.mubr.bf16.gmra.mrb[0].mxu0 %v593
      %v712 = vpop.f32.mrb[0].mxu0
      %v713 = vadd.f32 0.0, %v712
      %v714 = vpop.f32.mrb[0].mxu0
      %v715 = vpop.f32.mrb[0].mxu0
      %v716 = vadd.f32 0.0, %v715
      %v717 = vpop.f32.mrb[0].mxu0
      %718 = vmatprep.mubr.bf16.mxu0 0
      %719 = vmatmul.mubr.bf16.gmra.mrb[0].mxu0 %v594
      %v720 = vpop.f32.mrb[0].mxu0
      %v721 = vadd.f32 0.0, %v720
      %v722 = vpop.f32.mrb[0].mxu0
      %v723 = vpop.f32.mrb[0].mxu0
      %v724 = vadd.f32 0.0, %v723
      %v725 = vpop.f32.mrb[0].mxu0
      %726 = vmatprep.mubr.bf16.mxu0 0
      %727 = vmatmul.mubr.bf16.gmra.mrb[0].mxu0 %v595
      %v728 = vpop.f32.mrb[0].mxu0
      %v729 = vadd.f32 0.0, %v728
      %v730 = vpop.f32.mrb[0].mxu0
      %v731 = vpop.f32.mrb[0].mxu0
      %v732 = vadd.f32 0.0, %v731
      %v733 = vpop.f32.mrb[0].mxu0
      %734 = vmatprep.mubr.bf16.mxu0 0
      %735 = vmatmul.mubr.bf16.gmra.mrb[0].mxu0 %v596
      %v736 = vpop.f32.mrb[0].mxu0
      %v737 = vadd.f32 0.0, %v736
      %v738 = vpop.f32.mrb[0].mxu0
      %v739 = vpop.f32.mrb[0].mxu0
      %v740 = vadd.f32 0.0, %v739
      %v741 = vpop.f32.mrb[0].mxu0
      %742 = vmatprep.mubr.bf16.mxu0 0
      %743 = vmatmul.mubr.bf16.gmra.mrb[0].mxu0 %v597
      %v744 = vpop.f32.mrb[0].mxu0
      %v745 = vadd.f32 0.0, %v744
      %v746 = vpop.f32.mrb[0].mxu0
      %v747 = vpop.f32.mrb[0].mxu0
      %v748 = vadd.f32 0.0, %v747
      %v749 = vpop.f32.mrb[0].mxu0
      %750 = vdwg.mxu0
      %v767 = vunpack.c.l.b16 %v510
      %v768 = vunpack.c.l.b16 %v511
      %v769 = vunpack.c.l.b16 %v512
      %v770 = vunpack.c.l.b16 %v513
      %v771 = vunpack.c.l.b16 %v514
      %v772 = vunpack.c.l.b16 %v515
      %v773 = vunpack.c.l.b16 %v516
      %v774 = vunpack.c.l.b16 %v517
      %v775 = vunpack.c.l.b16 %v518
      %v776 = vunpack.c.l.b16 %v519
      %v777 = vunpack.c.l.b16 %v520
      %v778 = vunpack.c.l.b16 %v521
      %v779 = vunpack.c.l.b16 %v522
      %v780 = vunpack.c.l.b16 %v523
      %v781 = vunpack.c.l.b16 %v524
      %v782 = vunpack.c.l.b16 %v525
      %v783 = vpack.c.b16 %v768, %v767
      %v784 = vpack.c.b16 %v770, %v769
      %v785 = vpack.c.b16 %v772, %v771
      %v786 = vpack.c.b16 %v774, %v773
      %v787 = vpack.c.b16 %v776, %v775
      %v788 = vpack.c.b16 %v778, %v777
      %v789 = vpack.c.b16 %v780, %v779
      %v790 = vpack.c.b16 %v782, %v781
      %799 = vmatprep.subr.bf16.mxu0 0
      %800 = vmatpush1.bf16.msra.mxu0 %v783
      %801 = vmatprep.subr.bf16.mxu0 0
      %802 = vmatpush1.bf16.msra.mxu0 %v784
      %803 = vmatprep.subr.bf16.mxu0 0
      %804 = vmatpush1.bf16.msra.mxu0 %v785
      %805 = vmatprep.subr.bf16.mxu0 0
      %806 = vmatpush1.bf16.msra.mxu0 %v786
      %807 = vmatprep.subr.bf16.mxu0 0
      %808 = vmatpush1.bf16.msra.mxu0 %v787
      %809 = vmatprep.subr.bf16.mxu0 0
      %810 = vmatpush1.bf16.msra.mxu0 %v788
      %811 = vmatprep.subr.bf16.mxu0 0
      %812 = vmatpush1.bf16.msra.mxu0 %v789
      %813 = vmatprep.subr.bf16.mxu0 0
      %814 = vmatpush1.bf16.msra.mxu0 %v790
      %815 = vmatprep.subr.bf16.mxu0 0
      %816 = vmatpush1.bf16.msra.mxu0 0
      %817 = vmatprep.subr.bf16.mxu0 0
      %818 = vmatpush1.bf16.msra.mxu0 0
      %819 = vmatprep.subr.bf16.mxu0 0
      %820 = vmatpush1.bf16.msra.mxu0 0
      %821 = vmatprep.subr.bf16.mxu0 0
      %822 = vmatpush1.bf16.msra.mxu0 0
      %823 = vmatprep.subr.bf16.mxu0 0
      %824 = vmatpush1.bf16.msra.mxu0 0
      %825 = vmatprep.subr.bf16.mxu0 0
      %826 = vmatpush1.bf16.msra.mxu0 0
      %827 = vmatprep.subr.bf16.mxu0 0
      %828 = vmatpush1.bf16.msra.mxu0 0
      %829 = vmatprep.subr.bf16.mxu0 0
      %830 = vmatpush1.bf16.msra.mxu0 0
      %831 = vmatprep.mubr.bf16.mxu0 0
      %832 = vmatmul.mubr.bf16.gmra.mrb[0].mxu0 %v502
      %v833 = vpop.f32.mrb[0].mxu0
      %v834 = vadd.f32 %v689, %v833
      %v835 = vpop.f32.mrb[0].mxu0
      %v836 = vpop.f32.mrb[0].mxu0
      %v837 = vadd.f32 %v692, %v836
      %v838 = vpop.f32.mrb[0].mxu0
      %839 = vmatprep.mubr.bf16.mxu0 0
      %840 = vmatmul.mubr.bf16.gmra.mrb[0].mxu0 %v503
      %v841 = vpop.f32.mrb[0].mxu0
      %v842 = vadd.f32 %v697, %v841
      %v843 = vpop.f32.mrb[0].mxu0
      %v844 = vpop.f32.mrb[0].mxu0
      %v845 = vadd.f32 %v700, %v844
      %v846 = vpop.f32.mrb[0].mxu0
      %847 = vmatprep.mubr.bf16.mxu0 0
      %848 = vmatmul.mubr.bf16.gmra.mrb[0].mxu0 %v504
      %v849 = vpop.f32.mrb[0].mxu0
      %v850 = vadd.f32 %v705, %v849
      %v851 = vpop.f32.mrb[0].mxu0
      %v852 = vpop.f32.mrb[0].mxu0
      %v853 = vadd.f32 %v708, %v852
      %v854 = vpop.f32.mrb[0].mxu0
      %855 = vmatprep.mubr.bf16.mxu0 0
      %856 = vmatmul.mubr.bf16.gmra.mrb[0].mxu0 %v505
      %v857 = vpop.f32.mrb[0].mxu0
      %v858 = vadd.f32 %v713, %v857
      %v859 = vpop.f32.mrb[0].mxu0
      %v860 = vpop.f32.mrb[0].mxu0
      %v861 = vadd.f32 %v716, %v860
      %v862 = vpop.f32.mrb[0].mxu0
      %863 = vmatprep.mubr.bf16.mxu0 0
      %864 = vmatmul.mubr.bf16.gmra.mrb[0].mxu0 %v506
      %v865 = vpop.f32.mrb[0].mxu0
      %v866 = vadd.f32 %v721, %v865
      %v867 = vpop.f32.mrb[0].mxu0
      %v868 = vpop.f32.mrb[0].mxu0
      %v869 = vadd.f32 %v724, %v868
      %v870 = vpop.f32.mrb[0].mxu0
      %871 = vmatprep.mubr.bf16.mxu0 0
      %872 = vmatmul.mubr.bf16.gmra.mrb[0].mxu0 %v507
      %v873 = vpop.f32.mrb[0].mxu0
      %v874 = vadd.f32 %v729, %v873
      %v875 = vpop.f32.mrb[0].mxu0
      %v876 = vpop.f32.mrb[0].mxu0
      %v877 = vadd.f32 %v732, %v876
      %v878 = vpop.f32.mrb[0].mxu0
      %879 = vmatprep.mubr.bf16.mxu0 0
      %880 = vmatmul.mubr.bf16.gmra.mrb[0].mxu0 %v508
      %v881 = vpop.f32.mrb[0].mxu0
      %v882 = vadd.f32 %v737, %v881
      %v883 = vpop.f32.mrb[0].mxu0
      %v884 = vpop.f32.mrb[0].mxu0
      %v885 = vadd.f32 %v740, %v884
      %v886 = vpop.f32.mrb[0].mxu0
      %887 = vmatprep.mubr.bf16.mxu0 0
      %888 = vmatmul.mubr.bf16.gmra.mrb[0].mxu0 %v509
      %v889 = vpop.f32.mrb[0].mxu0
      %v890 = vadd.f32 %v745, %v889
      %v891 = vpop.f32.mrb[0].mxu0
      %v892 = vpop.f32.mrb[0].mxu0
      %v893 = vadd.f32 %v748, %v892
      %v894 = vpop.f32.mrb[0].mxu0
      %895 = vdwg.mxu0
      %v896 = vld [vmem:[%s5] sm:$0x1]
      %v898 = vlaneseq
      %v899 = vshrl.u32 %v898, 7
      %v900 = vsub.s32 0, %v899
      %v901 = vrot.slane %v896, %v900
      %v903 = vadd.f32 %v834, %v901
      %v904 = vadd.f32 %v837, %v901
      %v905 = vadd.f32 %v842, %v901
      %v906 = vadd.f32 %v845, %v901
      %v907 = vadd.f32 %v850, %v901
      %v908 = vadd.f32 %v853, %v901
      %v909 = vadd.f32 %v858, %v901
      %v910 = vadd.f32 %v861, %v901
      %v911 = vadd.f32 %v866, %v901
      %v912 = vadd.f32 %v869, %v901
      %v913 = vadd.f32 %v874, %v901
      %v914 = vadd.f32 %v877, %v901
      %v915 = vadd.f32 %v882, %v901
      %v916 = vadd.f32 %v885, %v901
      %v917 = vadd.f32 %v890, %v901
      %v918 = vadd.f32 %v893, %v901
      %v919 = vmax.f32 %v903, 0.0
      %v920 = vmax.f32 %v904, 0.0
      %v921 = vmax.f32 %v905, 0.0
      %v922 = vmax.f32 %v906, 0.0
      %v923 = vmax.f32 %v907, 0.0
      %v924 = vmax.f32 %v908, 0.0
      %v925 = vmax.f32 %v909, 0.0
      %v926 = vmax.f32 %v910, 0.0
      %v927 = vmax.f32 %v911, 0.0
      %v928 = vmax.f32 %v912, 0.0
      %v929 = vmax.f32 %v913, 0.0
      %v930 = vmax.f32 %v914, 0.0
      %v931 = vmax.f32 %v915, 0.0
      %v932 = vmax.f32 %v916, 0.0
      %v933 = vmax.f32 %v917, 0.0
      %v934 = vmax.f32 %v918, 0.0
      %v935 = vpack.c.bf16 %v920, %v919
      %v936 = vpack.c.bf16 %v922, %v921
      %v937 = vpack.c.bf16 %v924, %v923
      %v938 = vpack.c.bf16 %v926, %v925
      %v939 = vpack.c.bf16 %v928, %v927
      %v940 = vpack.c.bf16 %v930, %v929
      %v941 = vpack.c.bf16 %v932, %v931
      %v942 = vpack.c.bf16 %v934, %v933
      %v951 = vunpack.c.l.b16 %v935
      %v952 = vunpack.c.h.b16 %v935
      %v953 = vunpack.c.l.b16 %v936
      %v954 = vunpack.c.h.b16 %v936
      %v955 = vunpack.c.l.b16 %v937
      %v956 = vunpack.c.h.b16 %v937
      %v957 = vunpack.c.l.b16 %v938
      %v958 = vunpack.c.h.b16 %v938
      %v959 = vunpack.c.l.b16 %v939
      %v960 = vunpack.c.h.b16 %v939
      %v961 = vunpack.c.l.b16 %v940
      %v962 = vunpack.c.h.b16 %v940
      %v963 = vunpack.c.l.b16 %v941
      %v964 = vunpack.c.h.b16 %v941
      %v965 = vunpack.c.l.b16 %v942
      %v966 = vunpack.c.h.b16 %v942
      %v967 = vpack.c.b16 %v951, %v951
      %v968 = vpack.c.b16 %v952, %v952
      %v969 = vpack.c.b16 %v953, %v953
      %v970 = vpack.c.b16 %v954, %v954
      %v971 = vpack.c.b16 %v955, %v955
      %v972 = vpack.c.b16 %v956, %v956
      %v973 = vpack.c.b16 %v957, %v957
      %v974 = vpack.c.b16 %v958, %v958
      %v975 = vpack.c.b16 %v959, %v959
      %v976 = vpack.c.b16 %v960, %v960
      %v977 = vpack.c.b16 %v961, %v961
      %v978 = vpack.c.b16 %v962, %v962
      %v979 = vpack.c.b16 %v963, %v963
      %v980 = vpack.c.b16 %v964, %v964
      %v981 = vpack.c.b16 %v965, %v965
      %v982 = vpack.c.b16 %v966, %v966
      %999 = vst [vmem:[#allocation12] sm:$0xf] %v967
      %1000 = vst [vmem:[#allocation12 + $0x4] sm:$0xf] %v968
      %1001 = vst [vmem:[#allocation12 + $0x8] sm:$0xf] %v969
      %1002 = vst [vmem:[#allocation12 + $0xc] sm:$0xf] %v970
      %1003 = vst [vmem:[#allocation12 + $0x10] sm:$0xf] %v971
      %1004 = vst [vmem:[#allocation12 + $0x14] sm:$0xf] %v972
      %1005 = vst [vmem:[#allocation12 + $0x18] sm:$0xf] %v973
      %1006 = vst [vmem:[#allocation12 + $0x1c] sm:$0xf] %v974
      %1007 = vst [vmem:[#allocation12 + $0x20] sm:$0xf] %v975
      %1008 = vst [vmem:[#allocation12 + $0x24] sm:$0xf] %v976
      %1009 = vst [vmem:[#allocation12 + $0x28] sm:$0xf] %v977
      %1010 = vst [vmem:[#allocation12 + $0x2c] sm:$0xf] %v978
      %1011 = vst [vmem:[#allocation12 + $0x30] sm:$0xf] %v979
      %1012 = vst [vmem:[#allocation12 + $0x34] sm:$0xf] %v980
      %1013 = vst [vmem:[#allocation12 + $0x38] sm:$0xf] %v981
      %1014 = vst [vmem:[#allocation12 + $0x3c] sm:$0xf] %v982
    $region53: #{tpu_custom_call.1} parent=1 // pred_fallthru
      _
    // Predicated region
    $region54: #{tpu_custom_call.1} parent=1 // pred_check
      _
    $region55: #{tpu_custom_call.1} parent=1 // pred_check_branch
      %1016 = sbr.rel (0) target = $region57
    $region56: #{tpu_custom_call.1} parent=1 // pred_region
      %s1018 = ssub.s32 1024, 1024
      %1019 = vsyncadd [#allocation5], %s1018
      %s1020 = sshll.u32 [#allocation12], 4
      %s1021 = int_to_ptr.vmem [resolvable:$true] %s1020
      %1026 = dma.vmem_to_hbm [thread:$0]  %s1021, 1024, %s6, [#allocation5], 64, 64, 4
    $region57: #{tpu_custom_call.1} parent=1 // pred_fallthru
      _
    // Predicated region
    $region58: #{tpu_custom_call.1} parent=1 // pred_check
      _
    $region59: #{tpu_custom_call.1} parent=1 // pred_check_branch
      %1028 = sbr.rel (0) target = $region61
    $region60: #{tpu_custom_call.1} parent=1 // pred_region
      %1029 = dma.done [#allocation5], 1024
    $region61: #{tpu_custom_call.1} parent=1 // pred_fallthru
      _
    %1030 = vsyncpa [#allocation4], 1
    %1031 = vsyncpa [#allocation7], 1
    %1032 = vsyncpa [#allocation10], 1
    %1033 = vsyncpa [#allocation5], 1

</llo_original>
